<compile_context>
chip_gen: v7x
topology: tpu7x:2x2x1
jax: 0.10.0
libtpu: 0.0.40
codegen_flags: <defaults>
</compile_context>

<pallas_src>
import functools

import jax
import jax.numpy as jnp
from jax.experimental import pallas as pl
from jax.experimental.pallas import tpu as pltpu

KPAD = 128  # lane-padded cluster axis


def _dec_kernel(x_ref, w1_ref, w2_ref, w3ct_ref, pslab_ref,
                zh_ref, assign_ref, pooledt_ref, scal_ref,
                *, alpha, n_clusters):
    f32, bf16 = jnp.float32, jnp.bfloat16
    eps = 1e-5

    x = x_ref[...]                                   # (B, Din) f32
    B, Din = x.shape
    H = w1_ref.shape[1]                              # true hidden width
    HPAD = w2_ref.shape[1]                           # lane-padded hidden width (>= H)
    K = n_clusters
    din_pad = w3ct_ref.shape[1] - KPAD
    inv_alpha = 1.0 / float(alpha)

    # ---- packed parameter slab: one DMA instead of nine ----
    ps = pslab_ref[...]                              # (8, W) f32, single vreg-ish load
    b1, g1, be1 = ps[0:1, :H], ps[1:2, :H], ps[2:3, :H]
    b2, g2, be2 = ps[3:4, :HPAD], ps[4:5, :HPAD], ps[5:6, :HPAD]   # pad lanes are 0
    b3 = ps[6:7, :Din]
    a1, a2 = ps[7:8, 0:1], ps[7:8, 1:2]              # PReLU slopes (scalars in the slab)

    # ---- Linear1 (bf16 MXU, f32 acc) + BatchNorm1d(batch stats) + PReLU ----
    h = jnp.dot(x.astype(bf16), w1_ref[...], preferred_element_type=f32) + b1
    mu = jnp.mean(h, axis=0, keepdims=True)
    var = jnp.mean((h - mu) * (h - mu), axis=0, keepdims=True)
    h = (h - mu) * jax.lax.rsqrt(var + eps) * g1 + be1
    h = jnp.where(h >= 0.0, h, a1 * h)
    # Dropout(0.1) -> identity (see TODO in header).

    # ---- Linear2 + BN + PReLU -> z_hidden, computed lane-dense (B, HPAD) ----
    # w2 / b2 / g2 / be2 are zero-padded to HPAD, so padding columns are exactly 0.
    h = jnp.dot(h.astype(bf16), w2_ref[...], preferred_element_type=f32) + b2
    mu = jnp.mean(h, axis=0, keepdims=True)
    var = jnp.mean((h - mu) * (h - mu), axis=0, keepdims=True)
    h = (h - mu) * jax.lax.rsqrt(var + eps) * g2 + be2
    z_hidden = jnp.where(h >= 0.0, h, a2 * h)        # (B, HPAD) f32, pad cols == 0

    # ---- fused Linear3 + cluster-center matmul: one wide MXU result ----
    w3ct = w3ct_ref[...]                             # (HPAD, din_pad + 128) bf16
    zb = z_hidden.astype(bf16)
    r = jnp.dot(zb, w3ct, preferred_element_type=f32)          # (B, din_pad + 128)
    z_recon = r[:, :Din] + b3                                  # (B, Din)
    zc = r[:, din_pad:]                                        # (B, 128); pad cols == 0

    # ---- Student-t soft assignments, lane-wide (128) with padding masked ----
    ct_f32 = w3ct[:, din_pad:].astype(f32)                     # (HPAD, 128)
    cc = jnp.sum(ct_f32 * ct_f32, axis=0, keepdims=True)       # (1, 128); pads 0
    zz = jnp.sum(z_hidden * z_hidden, axis=1, keepdims=True)   # (B, 1)
    d2 = jnp.maximum(zz + cc - 2.0 * zc, 0.0)
    q = 1.0 / (1.0 + d2 * inv_alpha)
    expn = (float(alpha) + 1.0) / 2.0
    if expn != 1.0:                                  # trace-time: skip exp/log when alpha == 1
        q = jnp.exp(expn * jnp.log(q))
    lane = jax.lax.broadcasted_iota(jnp.int32, (1, KPAD), 1)
    col_mask = lane < K
    q = jnp.where(col_mask, q, 0.0)
    # exact divide here so row sums stay == 1 (see review correctness note)
    assignments = q / jnp.sum(q, axis=1, keepdims=True)        # (B, 128); pads exactly 0

    # ---- target distribution p and KL(p || assignments), reduction='batchmean' ----
    col_sum = jnp.sum(assignments, axis=0, keepdims=True)      # (1, 128)
    w = (assignments * assignments) / jnp.where(col_mask, col_sum, 1.0)
    p = w / jnp.sum(w, axis=1, keepdims=True)
    safe_p = jnp.where(col_mask, p, 1.0)
    safe_a = jnp.where(col_mask, assignments, 1.0)
    kl_elem = p * (jnp.log(safe_p) - jnp.log(safe_a))
    kl = jnp.sum(jnp.sum(kl_elem, axis=1, keepdims=True),
                 axis=0, keepdims=True) * (1.0 / B)

    # ---- reconstruction MSE ----
    diff = z_recon - x
    recon = jnp.sum(jnp.sum(diff * diff, axis=1, keepdims=True),
                    axis=0, keepdims=True) * (1.0 / (B * Din))

    # ---- collapse regularizer: std(col_sums, ddof=1) / mean(col_sums) ----
    col_mean = jnp.sum(col_sum, axis=1, keepdims=True) * (1.0 / K)
    dev = jnp.where(col_mask, col_sum - col_mean, 0.0)
    col_var = jnp.sum(dev * dev, axis=1, keepdims=True) / (K - 1)
    collapse = jnp.sqrt(col_var) * pl.reciprocal(col_mean, approx=True)

    total = kl + 0.1 * recon + 0.01 * collapse

    # ---- pooled^T = z_hidden^T @ assignments (contract batch) : lane-dense (HPAD,128) ----
    pooled_t = jax.lax.dot_general(zb, assignments.astype(bf16),
                                   (((0,), (0,)), ((), ())),
                                   preferred_element_type=f32)

    # ---- lane-dense packed outputs (full unmasked stores) ----
    zh_ref[...] = z_hidden
    assign_ref[...] = assignments
    pooledt_ref[...] = pooled_t
    scal_ref[...] = (jnp.where(lane == 0, kl, 0.0)
                     + jnp.where(lane == 1, recon, 0.0)
                     + jnp.where(lane == 2, total, 0.0)
                     + jnp.where(lane == 3, collapse, 0.0))


def dec_clustering_forward(x, params, *, alpha=0.5):
    f32, bf16 = jnp.float32, jnp.bfloat16
    alpha = float(alpha)
    B, Din = x.shape
    H = params["w1"].shape[1]
    K = params["centers"].shape[0]
    assert K <= KPAD, "n_clusters must be <= 128 for this layout"

    hpad = max(KPAD, ((H + 127) // 128) * 128)       # lane-padded hidden width
    din_pad = ((Din + 127) // 128) * 128
    slab_w = max(din_pad, hpad)

    # ---- host-side packing (layout plumbing, done once per call) ----
    # fused [W3 | centers^T] RHS, zero-padded so both result slabs are lane-aligned
    w3ct = jnp.zeros((hpad, din_pad + KPAD), f32)
    w3ct = w3ct.at[:H, :Din].set(params["w3"])
    w3ct = w3ct.at[:H, din_pad:din_pad + K].set(params["centers"].T)

    # w2 padded on its output dim -> z_hidden is computed lane-dense in-kernel
    w2p = jnp.zeros((H, hpad), f32).at[:, :H].set(params["w2"])

    # all small vectors / scalars in one slab (rows: b1,g1,be1,b2,g2,be2,b3,[a1,a2])
    pslab = jnp.zeros((8, slab_w), f32)
    pslab = pslab.at[0, :H].set(params["b1"])
    pslab = pslab.at[1, :H].set(params["g1"])
    pslab = pslab.at[2, :H].set(params["be1"])
    pslab = pslab.at[3, :H].set(params["b2"])
    pslab = pslab.at[4, :H].set(params["g2"])
    pslab = pslab.at[5, :H].set(params["be2"])
    pslab = pslab.at[6, :Din].set(params["b3"])
    pslab = pslab.at[7, 0].set(params["a1"])
    pslab = pslab.at[7, 1].set(params["a2"])

    out_shapes = (
        jax.ShapeDtypeStruct((B, hpad), f32),        # z_hidden (lane padded)
        jax.ShapeDtypeStruct((B, KPAD), f32),        # assignments (lane padded)
        jax.ShapeDtypeStruct((hpad, KPAD), f32),     # pooled^T (lane dense)
        jax.ShapeDtypeStruct((1, KPAD), f32),        # [kl, recon, total, collapse, 0...]
    )

    vmem = pl.BlockSpec(memory_space=pltpu.MemorySpace.VMEM)
    kernel = functools.partial(_dec_kernel, alpha=alpha, n_clusters=K)

    zh, assign, pooled_t, scal = pl.pallas_call(
        kernel,
        out_shape=out_shapes,
        in_specs=[vmem] * 5,
        out_specs=(vmem,) * 4,
    )(x.astype(f32),
      params["w1"].astype(bf16), w2p.astype(bf16), w3ct.astype(bf16), pslab)

    z_hidden = zh[:, :H]
    assignments = assign[:, :K]
    pooled = pooled_t[:H, :K].T
    kl, recon, total = scal[0, 0], scal[0, 1], scal[0, 2]
    return assignments, pooled, kl, recon, total, z_hidden


def _reference_forward(x, params, *, alpha=0.5):
    """Pure-JAX reference mirroring the kernel's precision (bf16 matmuls, f32 math)."""
    f32, bf16 = jnp.float32, jnp.bfloat16
    eps = 1e-5

    def bn_prelu(h, g, be, a):
        mu = jnp.mean(h, axis=0, keepdims=True)
        var = jnp.mean((h - mu) ** 2, axis=0, keepdims=True)
        h = (h - mu) * jax.lax.rsqrt(var + eps) * g[None, :] + be[None, :]
        return jnp.where(h >= 0.0, h, a * h)

    h = jnp.dot(x.astype(bf16), params["w1"].astype(bf16),
                preferred_element_type=f32) + params["b1"][None, :]
    h = bn_prelu(h, params["g1"], params["be1"], params["a1"])
    h = jnp.dot(h.astype(bf16), params["w2"].astype(bf16),
                preferred_element_type=f32) + params["b2"][None, :]
    z_hidden = bn_prelu(h, params["g2"], params["be2"], params["a2"])

    zb = z_hidden.astype(bf16)
    ct = params["centers"].T.astype(bf16)
    z_recon = jnp.dot(zb, params["w3"].astype(bf16),
                      preferred_element_type=f32) + params["b3"][None, :]
    zc = jnp.dot(zb, ct, preferred_element_type=f32)
    cc = jnp.sum(ct.astype(f32) ** 2, axis=0, keepdims=True)
    zz = jnp.sum(z_hidden ** 2, axis=1, keepdims=True)
    d2 = jnp.maximum(zz + cc - 2.0 * zc, 0.0)
    q = 1.0 / (1.0 + d2 / alpha)
    expn = (alpha + 1.0) / 2.0
    if expn != 1.0:
        q = jnp.exp(expn * jnp.log(q))
    assignments = q / jnp.sum(q, axis=1, keepdims=True)
    w = assignments ** 2 / jnp.sum(assignments, axis=0, keepdims=True)
    p = w / jnp.sum(w, axis=1, keepdims=True)
    kl = jnp.sum(p * (jnp.log(p) - jnp.log(assignments))) / x.shape[0]
    recon = jnp.mean((z_recon - x) ** 2)
    col = jnp.sum(assignments, axis=0)
    collapse = jnp.std(col, ddof=1) / jnp.mean(col)
    total = kl + 0.1 * recon + 0.01 * collapse
    pooled = jax.lax.dot_general(assignments.astype(bf16), zb,
                                 (((0,), (0,)), ((), ())),
                                 preferred_element_type=f32)
    return assignments, pooled, kl, recon, total, z_hidden


def _make_params(key, input_dim, hidden_dim, n_clusters):
    ks = jax.random.split(key, 8)
    s1 = 1.0 / jnp.sqrt(jnp.float32(input_dim))
    s2 = 1.0 / jnp.sqrt(jnp.float32(hidden_dim))
    xb = jnp.sqrt(6.0 / (n_clusters + hidden_dim))
    return {
        "w1": jax.random.normal(ks[0], (input_dim, hidden_dim), jnp.float32) * s1,
        "b1": jax.random.normal(ks[1], (hidden_dim,), jnp.float32) * 0.01,
        "g1": jnp.ones((hidden_dim,), jnp.float32),
        "be1": jnp.zeros((hidden_dim,), jnp.float32),
        "a1": jnp.float32(0.25),                     # PReLU default slope
        "w2": jax.random.normal(ks[2], (hidden_dim, hidden_dim), jnp.float32) * s2,
        "b2": jax.random.normal(ks[3], (hidden_dim,), jnp.float32) * 0.01,
        "g2": jnp.ones((hidden_dim,), jnp.float32),
        "be2": jnp.zeros((hidden_dim,), jnp.float32),
        "a2": jnp.float32(0.25),
        "w3": jax.random.normal(ks[4], (hidden_dim, input_dim), jnp.float32) * s2,
        "b3": jax.random.normal(ks[5], (input_dim,), jnp.float32) * 0.01,
        "centers": jax.random.uniform(ks[6], (n_clusters, hidden_dim), jnp.float32,
                                      minval=-xb, maxval=xb),
    }


if __name__ == "__main__":
    B, INPUT_DIM, HIDDEN_DIM, N_CLUSTERS = 16, 128, 64, 8
    key = jax.random.PRNGKey(0)
    k_x, k_p = jax.random.split(key)

    x = jax.random.normal(k_x, (B, INPUT_DIM), jnp.float32)
    params = _make_params(k_p, INPUT_DIM, HIDDEN_DIM, N_CLUSTERS)

    outs = dec_clustering_forward(x, params, alpha=0.5)
    outs = jax.block_until_ready(outs)
    assignments, pooled, kl, recon, total, z_hidden = outs

    # shape / sanity checks
    assert assignments.shape == (B, N_CLUSTERS)
    assert pooled.shape == (N_CLUSTERS, HIDDEN_DIM)
    assert z_hidden.shape == (B, HIDDEN_DIM)
    assert bool(jnp.all(jnp.isfinite(assignments)))
    assert bool(jnp.all(jnp.isfinite(jnp.stack([kl, recon, total]))))
    assert bool(jnp.allclose(jnp.sum(assignments, axis=1), 1.0, atol=1e-3))

    # cross-check against a pure-JAX reference with the same (autocast-style) precision
    r_as, r_pool, r_kl, r_rec, r_tot, r_zh = _reference_forward(x, params, alpha=0.5)
    tol = dict(atol=2e-3, rtol=2e-2)
    assert bool(jnp.allclose(assignments, r_as, **tol))
    assert bool(jnp.allclose(z_hidden, r_zh, **tol))
    assert bool(jnp.allclose(pooled, r_pool, **tol))
    assert bool(jnp.allclose(jnp.stack([kl, recon, total]),
                             jnp.stack([r_kl, r_rec, r_tot]), **tol))

    print("KERNEL_OK")
</pallas_src>

<mosaic_0001>
module attributes {stable_mosaic.version = 11 : i64} {
  func.func @_dec_kernel(%arg0: memref<16x128xf32, #tpu.memory_space<vmem>>, %arg1: memref<128x64xbf16, #tpu.memory_space<vmem>>, %arg2: memref<64x128xbf16, #tpu.memory_space<vmem>>, %arg3: memref<128x256xbf16, #tpu.memory_space<vmem>>, %arg4: memref<8x128xf32, #tpu.memory_space<vmem>>, %arg5: memref<16x128xf32, #tpu.memory_space<vmem>>, %arg6: memref<16x128xf32, #tpu.memory_space<vmem>>, %arg7: memref<128x128xf32, #tpu.memory_space<vmem>>, %arg8: memref<1x128xf32, #tpu.memory_space<vmem>>) attributes {dimension_semantics = [], scalar_prefetch = 0 : i64, scratch_operands = 0 : i64, tpu.core_type = #tpu.core_type<tc>} {
    %c0 = arith.constant 0 : index
    %c0_0 = arith.constant 0 : index
    %0 = vector.load %arg0[%c0, %c0_0] : memref<16x128xf32, #tpu.memory_space<vmem>>, vector<16x128xf32>
    %c0_1 = arith.constant 0 : index
    %c0_2 = arith.constant 0 : index
    %1 = vector.load %arg4[%c0_1, %c0_2] : memref<8x128xf32, #tpu.memory_space<vmem>>, vector<8x128xf32>
    %2 = vector.extract_strided_slice %1 {offsets = [0, 0], sizes = [1, 64], strides = [1, 1]} : vector<8x128xf32> to vector<1x64xf32>
    %3 = vector.extract_strided_slice %1 {offsets = [1, 0], sizes = [1, 64], strides = [1, 1]} : vector<8x128xf32> to vector<1x64xf32>
    %4 = vector.extract_strided_slice %1 {offsets = [2, 0], sizes = [1, 64], strides = [1, 1]} : vector<8x128xf32> to vector<1x64xf32>
    %5 = vector.extract_strided_slice %1 {offsets = [3, 0], sizes = [1, 128], strides = [1, 1]} : vector<8x128xf32> to vector<1x128xf32>
    %6 = vector.extract_strided_slice %1 {offsets = [4, 0], sizes = [1, 128], strides = [1, 1]} : vector<8x128xf32> to vector<1x128xf32>
    %7 = vector.extract_strided_slice %1 {offsets = [5, 0], sizes = [1, 128], strides = [1, 1]} : vector<8x128xf32> to vector<1x128xf32>
    %8 = vector.extract_strided_slice %1 {offsets = [6, 0], sizes = [1, 128], strides = [1, 1]} : vector<8x128xf32> to vector<1x128xf32>
    %9 = vector.extract_strided_slice %1 {offsets = [7, 0], sizes = [1, 1], strides = [1, 1]} : vector<8x128xf32> to vector<1x1xf32>
    %10 = vector.extract_strided_slice %1 {offsets = [7, 1], sizes = [1, 1], strides = [1, 1]} : vector<8x128xf32> to vector<1x1xf32>
    %11 = arith.truncf %0 : vector<16x128xf32> to vector<16x128xbf16>
    %c0_3 = arith.constant 0 : index
    %c0_4 = arith.constant 0 : index
    %12 = vector.load %arg1[%c0_3, %c0_4] : memref<128x64xbf16, #tpu.memory_space<vmem>>, vector<128x64xbf16>
    %cst = arith.constant dense<0.000000e+00> : vector<16x64xf32>
    %13 = tpu.matmul %11, %12, %cst {dimension_numbers = #tpu.dot_dimension_numbers<[1], [0], [0], [1], [0, 0, 1, 1], [], []>} : vector<16x128xbf16>, vector<128x64xbf16>, vector<16x64xf32> -> vector<16x64xf32>
    %14 = vector.broadcast %2 : vector<1x64xf32> to vector<16x64xf32>
    %15 = arith.addf %13, %14 : vector<16x64xf32>
    %cst_5 = arith.constant dense<0.000000e+00> : vector<64xf32>
    %16 = vector.multi_reduction <add>, %15, %cst_5 [0] : vector<16x64xf32> to vector<64xf32>
    %17 = vector.shape_cast %16 : vector<64xf32> to vector<1x64xf32>
    %cst_6 = arith.constant 1.600000e+01 : f32
    %18 = vector.broadcast %cst_6 : f32 to vector<1x64xf32>
    %19 = arith.divf %17, %18 : vector<1x64xf32>
    %20 = vector.broadcast %19 : vector<1x64xf32> to vector<16x64xf32>
    %21 = arith.subf %15, %20 : vector<16x64xf32>
    %22 = vector.broadcast %19 : vector<1x64xf32> to vector<16x64xf32>
    %23 = arith.subf %15, %22 : vector<16x64xf32>
    %24 = arith.mulf %21, %23 : vector<16x64xf32>
    %cst_7 = arith.constant dense<0.000000e+00> : vector<64xf32>
    %25 = vector.multi_reduction <add>, %24, %cst_7 [0] : vector<16x64xf32> to vector<64xf32>
    %26 = vector.shape_cast %25 : vector<64xf32> to vector<1x64xf32>
    %cst_8 = arith.constant 1.600000e+01 : f32
    %27 = vector.broadcast %cst_8 : f32 to vector<1x64xf32>
    %28 = arith.divf %26, %27 : vector<1x64xf32>
    %29 = vector.broadcast %19 : vector<1x64xf32> to vector<16x64xf32>
    %30 = arith.subf %15, %29 : vector<16x64xf32>
    %cst_9 = arith.constant 9.99999974E-6 : f32
    %31 = vector.broadcast %cst_9 : f32 to vector<1x64xf32>
    %32 = arith.addf %28, %31 : vector<1x64xf32>
    %33 = math.rsqrt %32 : vector<1x64xf32>
    %34 = vector.broadcast %33 : vector<1x64xf32> to vector<16x64xf32>
    %35 = arith.mulf %30, %34 : vector<16x64xf32>
    %36 = vector.broadcast %3 : vector<1x64xf32> to vector<16x64xf32>
    %37 = arith.mulf %35, %36 : vector<16x64xf32>
    %38 = vector.broadcast %4 : vector<1x64xf32> to vector<16x64xf32>
    %39 = arith.addf %37, %38 : vector<16x64xf32>
    %cst_10 = arith.constant 0.000000e+00 : f32
    %40 = vector.broadcast %cst_10 : f32 to vector<16x64xf32>
    %41 = arith.cmpf oge, %39, %40 : vector<16x64xf32>
    %42 = vector.broadcast %9 : vector<1x1xf32> to vector<16x64xf32>
    %43 = arith.mulf %42, %39 : vector<16x64xf32>
    %44 = arith.select %41, %39, %43 : vector<16x64xi1>, vector<16x64xf32>
    %45 = arith.truncf %44 : vector<16x64xf32> to vector<16x64xbf16>
    %c0_11 = arith.constant 0 : index
    %c0_12 = arith.constant 0 : index
    %46 = vector.load %arg2[%c0_11, %c0_12] : memref<64x128xbf16, #tpu.memory_space<vmem>>, vector<64x128xbf16>
    %cst_13 = arith.constant dense<0.000000e+00> : vector<16x128xf32>
    %47 = tpu.matmul %45, %46, %cst_13 {dimension_numbers = #tpu.dot_dimension_numbers<[1], [0], [0], [1], [0, 0, 1, 1], [], []>} : vector<16x64xbf16>, vector<64x128xbf16>, vector<16x128xf32> -> vector<16x128xf32>
    %48 = vector.broadcast %5 : vector<1x128xf32> to vector<16x128xf32>
    %49 = arith.addf %47, %48 : vector<16x128xf32>
    %cst_14 = arith.constant dense<0.000000e+00> : vector<128xf32>
    %50 = vector.multi_reduction <add>, %49, %cst_14 [0] : vector<16x128xf32> to vector<128xf32>
    %51 = vector.shape_cast %50 : vector<128xf32> to vector<1x128xf32>
    %cst_15 = arith.constant 1.600000e+01 : f32
    %52 = vector.broadcast %cst_15 : f32 to vector<1x128xf32>
    %53 = arith.divf %51, %52 : vector<1x128xf32>
    %54 = vector.broadcast %53 : vector<1x128xf32> to vector<16x128xf32>
    %55 = arith.subf %49, %54 : vector<16x128xf32>
    %56 = vector.broadcast %53 : vector<1x128xf32> to vector<16x128xf32>
    %57 = arith.subf %49, %56 : vector<16x128xf32>
    %58 = arith.mulf %55, %57 : vector<16x128xf32>
    %cst_16 = arith.constant dense<0.000000e+00> : vector<128xf32>
    %59 = vector.multi_reduction <add>, %58, %cst_16 [0] : vector<16x128xf32> to vector<128xf32>
    %60 = vector.shape_cast %59 : vector<128xf32> to vector<1x128xf32>
    %cst_17 = arith.constant 1.600000e+01 : f32
    %61 = vector.broadcast %cst_17 : f32 to vector<1x128xf32>
    %62 = arith.divf %60, %61 : vector<1x128xf32>
    %63 = vector.broadcast %53 : vector<1x128xf32> to vector<16x128xf32>
    %64 = arith.subf %49, %63 : vector<16x128xf32>
    %cst_18 = arith.constant 9.99999974E-6 : f32
    %65 = vector.broadcast %cst_18 : f32 to vector<1x128xf32>
    %66 = arith.addf %62, %65 : vector<1x128xf32>
    %67 = math.rsqrt %66 : vector<1x128xf32>
    %68 = vector.broadcast %67 : vector<1x128xf32> to vector<16x128xf32>
    %69 = arith.mulf %64, %68 : vector<16x128xf32>
    %70 = vector.broadcast %6 : vector<1x128xf32> to vector<16x128xf32>
    %71 = arith.mulf %69, %70 : vector<16x128xf32>
    %72 = vector.broadcast %7 : vector<1x128xf32> to vector<16x128xf32>
    %73 = arith.addf %71, %72 : vector<16x128xf32>
    %cst_19 = arith.constant 0.000000e+00 : f32
    %74 = vector.broadcast %cst_19 : f32 to vector<16x128xf32>
    %75 = arith.cmpf oge, %73, %74 : vector<16x128xf32>
    %76 = vector.broadcast %10 : vector<1x1xf32> to vector<16x128xf32>
    %77 = arith.mulf %76, %73 : vector<16x128xf32>
    %78 = arith.select %75, %73, %77 : vector<16x128xi1>, vector<16x128xf32>
    %c0_20 = arith.constant 0 : index
    %c0_21 = arith.constant 0 : index
    %79 = vector.load %arg3[%c0_20, %c0_21] : memref<128x256xbf16, #tpu.memory_space<vmem>>, vector<128x256xbf16>
    %80 = arith.truncf %78 : vector<16x128xf32> to vector<16x128xbf16>
    %cst_22 = arith.constant dense<0.000000e+00> : vector<16x256xf32>
    %81 = tpu.matmul %80, %79, %cst_22 {dimension_numbers = #tpu.dot_dimension_numbers<[1], [0], [0], [1], [0, 0, 1, 1], [], []>} : vector<16x128xbf16>, vector<128x256xbf16>, vector<16x256xf32> -> vector<16x256xf32>
    %82 = vector.extract_strided_slice %81 {offsets = [0, 0], sizes = [16, 128], strides = [1, 1]} : vector<16x256xf32> to vector<16x128xf32>
    %83 = vector.broadcast %8 : vector<1x128xf32> to vector<16x128xf32>
    %84 = arith.addf %82, %83 : vector<16x128xf32>
    %85 = vector.extract_strided_slice %81 {offsets = [0, 128], sizes = [16, 128], strides = [1, 1]} : vector<16x256xf32> to vector<16x128xf32>
    %86 = vector.extract_strided_slice %79 {offsets = [0, 128], sizes = [128, 128], strides = [1, 1]} : vector<128x256xbf16> to vector<128x128xbf16>
    %87 = arith.extf %86 : vector<128x128xbf16> to vector<128x128xf32>
    %88 = arith.mulf %87, %87 : vector<128x128xf32>
    %cst_23 = arith.constant dense<0.000000e+00> : vector<128xf32>
    %89 = vector.multi_reduction <add>, %88, %cst_23 [0] : vector<128x128xf32> to vector<128xf32>
    %90 = vector.shape_cast %89 : vector<128xf32> to vector<1x128xf32>
    %91 = arith.mulf %78, %78 : vector<16x128xf32>
    %cst_24 = arith.constant dense<0.000000e+00> : vector<16xf32>
    %92 = vector.multi_reduction <add>, %91, %cst_24 [1] : vector<16x128xf32> to vector<16xf32>
    %93 = vector.shape_cast %92 : vector<16xf32> to vector<16x1xf32>
    %94 = vector.broadcast %93 : vector<16x1xf32> to vector<16x128xf32>
    %95 = vector.broadcast %90 : vector<1x128xf32> to vector<16x128xf32>
    %96 = arith.addf %94, %95 : vector<16x128xf32>
    %cst_25 = arith.constant 2.000000e+00 : f32
    %97 = vector.broadcast %cst_25 : f32 to vector<16x128xf32>
    %98 = arith.mulf %97, %85 : vector<16x128xf32>
    %99 = arith.subf %96, %98 : vector<16x128xf32>
    %cst_26 = arith.constant 0.000000e+00 : f32
    %100 = vector.broadcast %cst_26 : f32 to vector<16x128xf32>
    %101 = arith.maximumf %99, %100 : vector<16x128xf32>
    %cst_27 = arith.constant 2.000000e+00 : f32
    %102 = vector.broadcast %cst_27 : f32 to vector<16x128xf32>
    %103 = arith.mulf %101, %102 : vector<16x128xf32>
    %cst_28 = arith.constant 1.000000e+00 : f32
    %104 = vector.broadcast %cst_28 : f32 to vector<16x128xf32>
    %105 = arith.addf %104, %103 : vector<16x128xf32>
    %cst_29 = arith.constant 1.000000e+00 : f32
    %106 = vector.broadcast %cst_29 : f32 to vector<16x128xf32>
    %107 = arith.divf %106, %105 : vector<16x128xf32>
    %108 = math.log %107 : vector<16x128xf32>
    %cst_30 = arith.constant 7.500000e-01 : f32
    %109 = vector.broadcast %cst_30 : f32 to vector<16x128xf32>
    %110 = arith.mulf %109, %108 : vector<16x128xf32>
    %111 = math.exp %110 : vector<16x128xf32>
    %112 = tpu.iota {dimensions = array<i32: 1>} : vector<1x128xi32>
    %c8_i32 = arith.constant 8 : i32
    %113 = vector.broadcast %c8_i32 : i32 to vector<1x128xi32>
    %114 = arith.cmpi slt, %112, %113 : vector<1x128xi32>
    %cst_31 = arith.constant 0.000000e+00 : f32
    %115 = vector.shape_cast %114 : vector<1x128xi1> to vector<1x128xi1>
    %116 = vector.broadcast %115 : vector<1x128xi1> to vector<16x128xi1>
    %117 = vector.broadcast %cst_31 : f32 to vector<16x128xf32>
    %118 = arith.select %116, %111, %117 : vector<16x128xi1>, vector<16x128xf32>
    %cst_32 = arith.constant dense<0.000000e+00> : vector<16xf32>
    %119 = vector.multi_reduction <add>, %118, %cst_32 [1] : vector<16x128xf32> to vector<16xf32>
    %120 = vector.shape_cast %119 : vector<16xf32> to vector<16x1xf32>
    %121 = vector.broadcast %120 : vector<16x1xf32> to vector<16x128xf32>
    %122 = arith.divf %118, %121 : vector<16x128xf32>
    %cst_33 = arith.constant dense<0.000000e+00> : vector<128xf32>
    %123 = vector.multi_reduction <add>, %122, %cst_33 [0] : vector<16x128xf32> to vector<128xf32>
    %124 = vector.shape_cast %123 : vector<128xf32> to vector<1x128xf32>
    %125 = arith.mulf %122, %122 : vector<16x128xf32>
    %cst_34 = arith.constant 1.000000e+00 : f32
    %126 = vector.broadcast %cst_34 : f32 to vector<1x128xf32>
    %127 = arith.select %114, %124, %126 : vector<1x128xi1>, vector<1x128xf32>
    %128 = vector.broadcast %127 : vector<1x128xf32> to vector<16x128xf32>
    %129 = arith.divf %125, %128 : vector<16x128xf32>
    %cst_35 = arith.constant dense<0.000000e+00> : vector<16xf32>
    %130 = vector.multi_reduction <add>, %129, %cst_35 [1] : vector<16x128xf32> to vector<16xf32>
    %131 = vector.shape_cast %130 : vector<16xf32> to vector<16x1xf32>
    %132 = vector.broadcast %131 : vector<16x1xf32> to vector<16x128xf32>
    %133 = arith.divf %129, %132 : vector<16x128xf32>
    %cst_36 = arith.constant 1.000000e+00 : f32
    %134 = vector.shape_cast %114 : vector<1x128xi1> to vector<1x128xi1>
    %135 = vector.broadcast %134 : vector<1x128xi1> to vector<16x128xi1>
    %136 = vector.broadcast %cst_36 : f32 to vector<16x128xf32>
    %137 = arith.select %135, %133, %136 : vector<16x128xi1>, vector<16x128xf32>
    %cst_37 = arith.constant 1.000000e+00 : f32
    %138 = vector.shape_cast %114 : vector<1x128xi1> to vector<1x128xi1>
    %139 = vector.broadcast %138 : vector<1x128xi1> to vector<16x128xi1>
    %140 = vector.broadcast %cst_37 : f32 to vector<16x128xf32>
    %141 = arith.select %139, %122, %140 : vector<16x128xi1>, vector<16x128xf32>
    %142 = math.log %137 : vector<16x128xf32>
    %143 = math.log %141 : vector<16x128xf32>
    %144 = arith.subf %142, %143 : vector<16x128xf32>
    %145 = arith.mulf %133, %144 : vector<16x128xf32>
    %cst_38 = arith.constant dense<0.000000e+00> : vector<16xf32>
    %146 = vector.multi_reduction <add>, %145, %cst_38 [1] : vector<16x128xf32> to vector<16xf32>
    %147 = vector.shape_cast %146 : vector<16xf32> to vector<16x1xf32>
    %cst_39 = arith.constant dense<0.000000e+00> : vector<1xf32>
    %148 = vector.multi_reduction <add>, %147, %cst_39 [0] : vector<16x1xf32> to vector<1xf32>
    %149 = vector.shape_cast %148 : vector<1xf32> to vector<1x1xf32>
    %cst_40 = arith.constant 6.250000e-02 : f32
    %150 = vector.broadcast %cst_40 : f32 to vector<1x1xf32>
    %151 = arith.mulf %149, %150 : vector<1x1xf32>
    %152 = arith.subf %84, %0 : vector<16x128xf32>
    %153 = arith.mulf %152, %152 : vector<16x128xf32>
    %cst_41 = arith.constant dense<0.000000e+00> : vector<16xf32>
    %154 = vector.multi_reduction <add>, %153, %cst_41 [1] : vector<16x128xf32> to vector<16xf32>
    %155 = vector.shape_cast %154 : vector<16xf32> to vector<16x1xf32>
    %cst_42 = arith.constant dense<0.000000e+00> : vector<1xf32>
    %156 = vector.multi_reduction <add>, %155, %cst_42 [0] : vector<16x1xf32> to vector<1xf32>
    %157 = vector.shape_cast %156 : vector<1xf32> to vector<1x1xf32>
    %cst_43 = arith.constant 4.8828125E-4 : f32
    %158 = vector.broadcast %cst_43 : f32 to vector<1x1xf32>
    %159 = arith.mulf %157, %158 : vector<1x1xf32>
    %cst_44 = arith.constant dense<0.000000e+00> : vector<1xf32>
    %160 = vector.multi_reduction <add>, %124, %cst_44 [1] : vector<1x128xf32> to vector<1xf32>
    %161 = vector.shape_cast %160 : vector<1xf32> to vector<1x1xf32>
    %cst_45 = arith.constant 1.250000e-01 : f32
    %162 = vector.broadcast %cst_45 : f32 to vector<1x1xf32>
    %163 = arith.mulf %161, %162 : vector<1x1xf32>
    %164 = vector.broadcast %163 : vector<1x1xf32> to vector<1x128xf32>
    %165 = arith.subf %124, %164 : vector<1x128xf32>
    %cst_46 = arith.constant 0.000000e+00 : f32
    %166 = vector.broadcast %cst_46 : f32 to vector<1x128xf32>
    %167 = arith.select %114, %165, %166 : vector<1x128xi1>, vector<1x128xf32>
    %168 = arith.mulf %167, %167 : vector<1x128xf32>
    %cst_47 = arith.constant dense<0.000000e+00> : vector<1xf32>
    %169 = vector.multi_reduction <add>, %168, %cst_47 [1] : vector<1x128xf32> to vector<1xf32>
    %170 = vector.shape_cast %169 : vector<1xf32> to vector<1x1xf32>
    %cst_48 = arith.constant 7.000000e+00 : f32
    %171 = vector.broadcast %cst_48 : f32 to vector<1x1xf32>
    %172 = arith.divf %170, %171 : vector<1x1xf32>
    %173 = math.sqrt %172 : vector<1x1xf32>
    %174 = tpu.reciprocal %163 {approx = true} : vector<1x1xf32> -> vector<1x1xf32>
    %175 = arith.mulf %173, %174 : vector<1x1xf32>
    %cst_49 = arith.constant 1.000000e-01 : f32
    %176 = vector.broadcast %cst_49 : f32 to vector<1x1xf32>
    %177 = arith.mulf %176, %159 : vector<1x1xf32>
    %178 = arith.addf %151, %177 : vector<1x1xf32>
    %cst_50 = arith.constant 0.00999999977 : f32
    %179 = vector.broadcast %cst_50 : f32 to vector<1x1xf32>
    %180 = arith.mulf %179, %175 : vector<1x1xf32>
    %181 = arith.addf %178, %180 : vector<1x1xf32>
    %182 = arith.truncf %122 : vector<16x128xf32> to vector<16x128xbf16>
    %cst_51 = arith.constant dense<0.000000e+00> : vector<128x128xf32>
    %183 = tpu.matmul %80, %182, %cst_51 {dimension_numbers = #tpu.dot_dimension_numbers<[0], [0], [1], [1], [0, 1, 1, 1], [], []>} : vector<16x128xbf16>, vector<16x128xbf16>, vector<128x128xf32> -> vector<128x128xf32>
    %c0_52 = arith.constant 0 : index
    %c0_53 = arith.constant 0 : index
    %184 = vector.load %arg5[%c0_52, %c0_53] : memref<16x128xf32, #tpu.memory_space<vmem>>, vector<16x128xf32>
    tpu.vector_store %arg5[%c0_52, %c0_53], %78 {strides = array<i32>} : memref<16x128xf32, #tpu.memory_space<vmem>>, vector<16x128xf32>,
    %c0_54 = arith.constant 0 : index
    %c0_55 = arith.constant 0 : index
    %185 = vector.load %arg6[%c0_54, %c0_55] : memref<16x128xf32, #tpu.memory_space<vmem>>, vector<16x128xf32>
    tpu.vector_store %arg6[%c0_54, %c0_55], %122 {strides = array<i32>} : memref<16x128xf32, #tpu.memory_space<vmem>>, vector<16x128xf32>,
    %c0_56 = arith.constant 0 : index
    %c0_57 = arith.constant 0 : index
    %186 = vector.load %arg7[%c0_56, %c0_57] : memref<128x128xf32, #tpu.memory_space<vmem>>, vector<128x128xf32>
    tpu.vector_store %arg7[%c0_56, %c0_57], %183 {strides = array<i32>} : memref<128x128xf32, #tpu.memory_space<vmem>>, vector<128x128xf32>,
    %c0_i32 = arith.constant 0 : i32
    %187 = vector.broadcast %c0_i32 : i32 to vector<1x128xi32>
    %188 = arith.cmpi eq, %112, %187 : vector<1x128xi32>
    %cst_58 = arith.constant 0.000000e+00 : f32
    %189 = vector.shape_cast %151 : vector<1x1xf32> to vector<1x1xf32>
    %190 = vector.broadcast %189 : vector<1x1xf32> to vector<1x128xf32>
    %191 = vector.broadcast %cst_58 : f32 to vector<1x128xf32>
    %192 = arith.select %188, %190, %191 : vector<1x128xi1>, vector<1x128xf32>
    %c1_i32 = arith.constant 1 : i32
    %193 = vector.broadcast %c1_i32 : i32 to vector<1x128xi32>
    %194 = arith.cmpi eq, %112, %193 : vector<1x128xi32>
    %cst_59 = arith.constant 0.000000e+00 : f32
    %195 = vector.shape_cast %159 : vector<1x1xf32> to vector<1x1xf32>
    %196 = vector.broadcast %195 : vector<1x1xf32> to vector<1x128xf32>
    %197 = vector.broadcast %cst_59 : f32 to vector<1x128xf32>
    %198 = arith.select %194, %196, %197 : vector<1x128xi1>, vector<1x128xf32>
    %199 = arith.addf %192, %198 : vector<1x128xf32>
    %c2_i32 = arith.constant 2 : i32
    %200 = vector.broadcast %c2_i32 : i32 to vector<1x128xi32>
    %201 = arith.cmpi eq, %112, %200 : vector<1x128xi32>
    %cst_60 = arith.constant 0.000000e+00 : f32
    %202 = vector.shape_cast %181 : vector<1x1xf32> to vector<1x1xf32>
    %203 = vector.broadcast %202 : vector<1x1xf32> to vector<1x128xf32>
    %204 = vector.broadcast %cst_60 : f32 to vector<1x128xf32>
    %205 = arith.select %201, %203, %204 : vector<1x128xi1>, vector<1x128xf32>
    %206 = arith.addf %199, %205 : vector<1x128xf32>
    %c3_i32 = arith.constant 3 : i32
    %207 = vector.broadcast %c3_i32 : i32 to vector<1x128xi32>
    %208 = arith.cmpi eq, %112, %207 : vector<1x128xi32>
    %cst_61 = arith.constant 0.000000e+00 : f32
    %209 = vector.shape_cast %175 : vector<1x1xf32> to vector<1x1xf32>
    %210 = vector.broadcast %209 : vector<1x1xf32> to vector<1x128xf32>
    %211 = vector.broadcast %cst_61 : f32 to vector<1x128xf32>
    %212 = arith.select %208, %210, %211 : vector<1x128xi1>, vector<1x128xf32>
    %213 = arith.addf %206, %212 : vector<1x128xf32>
    %c0_62 = arith.constant 0 : index
    %c0_63 = arith.constant 0 : index
    %214 = vector.load %arg8[%c0_62, %c0_63] : memref<1x128xf32, #tpu.memory_space<vmem>>, vector<1x128xf32>
    tpu.vector_store %arg8[%c0_62, %c0_63], %213 {strides = array<i32>} : memref<1x128xf32, #tpu.memory_space<vmem>>, vector<1x128xf32>,
    return
  }
}

</mosaic_0001>

<llo_original>
// kernel: tpu_custom_call.1
$region0: #{tpu_custom_call.1}
  #allocation0 [shape = 'u32[]', space=smem, size = 0x4, offset = 0x4, fixed_abs, tag = 'smem constant byte address 0x4 - core index']
  #allocation1 [shape = 'u32[144,128]{1,0:T(1,128)}', space=vmem, size = 0x12000, scoped, tag = 'internal scratch']
  %s0 = inlined_call_operand.vmem [shape: f32[16,128], index: 0, kind: input, shape index: {}]
  %s1 = inlined_call_operand.vmem [shape: bf16[128,64], index: 1, kind: input, shape index: {}]
  %s2 = inlined_call_operand.vmem [shape: bf16[64,128], index: 2, kind: input, shape index: {}]
  %s3 = inlined_call_operand.hbm [shape: bf16[128,256], index: 3, kind: input, shape index: {}]
  %s4 = inlined_call_operand.vmem [shape: f32[8,128], index: 4, kind: input, shape index: {}]
  %s5 = inlined_call_operand.hbm [shape: f32[16,128], index: 5, kind: output, shape index: {0}]
  %s6 = inlined_call_operand.hbm [shape: f32[16,128], index: 6, kind: output, shape index: {1}]
  %s7 = inlined_call_operand.hbm [shape: f32[128,128], index: 7, kind: output, shape index: {2}]
  %s8 = inlined_call_operand.hbm [shape: f32[1,128], index: 8, kind: output, shape index: {3}]
  %9 = xla_tuple %s5, %s6, %s7, %s8
  %s10 = sld [smem:[#allocation0]]
  $region58: #{tpu_custom_call.1} parent=0
    _
  %s12 = ssub.s32 1, %s10
  %s13 = scalar_select 0, %s12, %s10
  $region1: #{tpu_custom_call.1} parent=0
    #allocation2 [shape = 'u8[65536]{0}', space=vmem, size = 0x10000, scoped, tag = 'input window, operand 3, single buffered']
    #allocation3 [shape = 's32[1]{0}', space=sflag, size = 0x4, scoped, tag = 'scoped memory for tpu_custom_call.1']
    #allocation4 [shape = 's32[1]{0}', space=sflag, size = 0x4, scoped, tag = 'scoped memory for tpu_custom_call.1']
    #allocation5 [shape = 'u8[8192]{0}', space=vmem, size = 0x2000, scoped, tag = 'output window, operand 0, single buffered']
    #allocation6 [shape = 'u8[8192]{0}', space=vmem, size = 0x2000, scoped, tag = 'output window, operand 1, single buffered']
    #allocation7 [shape = 's32[1]{0}', space=sflag, size = 0x4, scoped, tag = 'scoped memory for tpu_custom_call.1']
    #allocation8 [shape = 'u8[65536]{0}', space=vmem, size = 0x10000, scoped, tag = 'output window, operand 2, single buffered']
    #allocation9 [shape = 'u8[512]{0}', space=vmem, size = 0x400, scoped, tag = 'output window, operand 3, single buffered']
    #allocation10 [shape = 's32[1]{0}', space=sflag, size = 0x4, scoped, tag = 'scoped memory for tpu_custom_call.1']
    %14 = vsyncpa [#allocation3], 0
    %15 = vsyncpa [#allocation4], 0
    %16 = vsyncpa [#allocation7], 0
    %17 = vsyncpa [#allocation10], 0
    // Predicated region
    $region2: #{tpu_custom_call.1} parent=1 // pred_check
      _
    $region3: #{tpu_custom_call.1} parent=1 // pred_check_branch
      %19 = sbr.rel (0) target = $region5
    $region4: #{tpu_custom_call.1} parent=1 // pred_region
      _
    $region5: #{tpu_custom_call.1} parent=1 // pred_fallthru
      _
    // Predicated region
    $region6: #{tpu_custom_call.1} parent=1 // pred_check
      _
    $region7: #{tpu_custom_call.1} parent=1 // pred_check_branch
      %21 = sbr.rel (0) target = $region9
    $region8: #{tpu_custom_call.1} parent=1 // pred_region
      _
    $region9: #{tpu_custom_call.1} parent=1 // pred_fallthru
      _
    // Predicated region
    $region10: #{tpu_custom_call.1} parent=1 // pred_check
      _
    $region11: #{tpu_custom_call.1} parent=1 // pred_check_branch
      %23 = sbr.rel (0) target = $region13
    $region12: #{tpu_custom_call.1} parent=1 // pred_region
      _
    $region13: #{tpu_custom_call.1} parent=1 // pred_fallthru
      _
    // Predicated region
    $region14: #{tpu_custom_call.1} parent=1 // pred_check
      _
    $region15: #{tpu_custom_call.1} parent=1 // pred_check_branch
      %25 = sbr.rel (0) target = $region17
    $region16: #{tpu_custom_call.1} parent=1 // pred_region
      %s27 = ssub.s32 2048, 2048
      %28 = vsyncadd [#allocation3], %s27
      %s29 = sshll.u32 [#allocation2], 4
      %s30 = int_to_ptr.vmem [resolvable:$true] %s29
      %35 = dma.hbm_to_vmem [thread:$0]  %s3, 2048, %s30, [#allocation3], 128, 128, 8
    $region17: #{tpu_custom_call.1} parent=1 // pred_fallthru
      _
    // Predicated region
    $region18: #{tpu_custom_call.1} parent=1 // pred_check
      _
    $region19: #{tpu_custom_call.1} parent=1 // pred_check_branch
      %37 = sbr.rel (0) target = $region21
    $region20: #{tpu_custom_call.1} parent=1 // pred_region
      _
    $region21: #{tpu_custom_call.1} parent=1 // pred_fallthru
      _
    // Predicated region
    $region22: #{tpu_custom_call.1} parent=1 // pred_check
      _
    $region23: #{tpu_custom_call.1} parent=1 // pred_check_branch
      %39 = sbr.rel (0) target = $region25
    $region24: #{tpu_custom_call.1} parent=1 // pred_region
      %40 = dma.done [#allocation3], 2048
    $region25: #{tpu_custom_call.1} parent=1 // pred_fallthru
      _
    %v42 = vld [vmem:[%s0] sm:$0xff]
    %v43 = vld [vmem:[%s0 + $0x8] sm:$0xff]
    %v44 = vld [vmem:[%s4] sm:$0xff]
    %v45 = vpack.c.bf16 %v43, %v42
    %v46 = vld [vmem:[%s1] sm:$0xf]
    %v47 = vld [vmem:[%s1 + $0x4] sm:$0xf]
    %v48 = vld [vmem:[%s1 + $0x8] sm:$0xf]
    %v49 = vld [vmem:[%s1 + $0xc] sm:$0xf]
    %v50 = vld [vmem:[%s1 + $0x10] sm:$0xf]
    %v51 = vld [vmem:[%s1 + $0x14] sm:$0xf]
    %v52 = vld [vmem:[%s1 + $0x18] sm:$0xf]
    %v53 = vld [vmem:[%s1 + $0x1c] sm:$0xf]
    %v54 = vld [vmem:[%s1 + $0x20] sm:$0xf]
    %v55 = vld [vmem:[%s1 + $0x24] sm:$0xf]
    %v56 = vld [vmem:[%s1 + $0x28] sm:$0xf]
    %v57 = vld [vmem:[%s1 + $0x2c] sm:$0xf]
    %v58 = vld [vmem:[%s1 + $0x30] sm:$0xf]
    %v59 = vld [vmem:[%s1 + $0x34] sm:$0xf]
    %v60 = vld [vmem:[%s1 + $0x38] sm:$0xf]
    %v61 = vld [vmem:[%s1 + $0x3c] sm:$0xf]
    %v62 = vlaneseq
    %v63 = vshrl.u32 %v62, 7
    %v64 = vsub.s32 0, %v63
    %v65 = vrot.slane %v44, %v64
    %v82 = vunpack.c.l.b16 %v46
    %v83 = vunpack.c.l.b16 %v47
    %v84 = vunpack.c.l.b16 %v48
    %v85 = vunpack.c.l.b16 %v49
    %v86 = vunpack.c.l.b16 %v50
    %v87 = vunpack.c.l.b16 %v51
    %v88 = vunpack.c.l.b16 %v52
    %v89 = vunpack.c.l.b16 %v53
    %v90 = vunpack.c.l.b16 %v54
    %v91 = vunpack.c.l.b16 %v55
    %v92 = vunpack.c.l.b16 %v56
    %v93 = vunpack.c.l.b16 %v57
    %v94 = vunpack.c.l.b16 %v58
    %v95 = vunpack.c.l.b16 %v59
    %v96 = vunpack.c.l.b16 %v60
    %v97 = vunpack.c.l.b16 %v61
    %v98 = vpack.c.b16 %v83, %v82
    %v99 = vpack.c.b16 %v85, %v84
    %v100 = vpack.c.b16 %v87, %v86
    %v101 = vpack.c.b16 %v89, %v88
    %v102 = vpack.c.b16 %v91, %v90
    %v103 = vpack.c.b16 %v93, %v92
    %v104 = vpack.c.b16 %v95, %v94
    %v105 = vpack.c.b16 %v97, %v96
    %114 = vmatprep.subr.bf16.mxu0 0
    %115 = vmatpush1.bf16.msra.mxu0 %v98
    %116 = vmatprep.subr.bf16.mxu0 0
    %117 = vmatpush1.bf16.msra.mxu0 %v99
    %118 = vmatprep.subr.bf16.mxu0 0
    %119 = vmatpush1.bf16.msra.mxu0 %v100
    %120 = vmatprep.subr.bf16.mxu0 0
    %121 = vmatpush1.bf16.msra.mxu0 %v101
    %122 = vmatprep.subr.bf16.mxu0 0
    %123 = vmatpush1.bf16.msra.mxu0 %v102
    %124 = vmatprep.subr.bf16.mxu0 0
    %125 = vmatpush1.bf16.msra.mxu0 %v103
    %126 = vmatprep.subr.bf16.mxu0 0
    %127 = vmatpush1.bf16.msra.mxu0 %v104
    %128 = vmatprep.subr.bf16.mxu0 0
    %129 = vmatpush1.bf16.msra.mxu0 %v105
    %130 = vmatprep.subr.bf16.mxu0 0
    %131 = vmatpush1.bf16.msra.mxu0 0
    %132 = vmatprep.subr.bf16.mxu0 0
    %133 = vmatpush1.bf16.msra.mxu0 0
    %134 = vmatprep.subr.bf16.mxu0 0
    %135 = vmatpush1.bf16.msra.mxu0 0
    %136 = vmatprep.subr.bf16.mxu0 0
    %137 = vmatpush1.bf16.msra.mxu0 0
    %138 = vmatprep.subr.bf16.mxu0 0
    %139 = vmatpush1.bf16.msra.mxu0 0
    %140 = vmatprep.subr.bf16.mxu0 0
    %141 = vmatpush1.bf16.msra.mxu0 0
    %142 = vmatprep.subr.bf16.mxu0 0
    %143 = vmatpush1.bf16.msra.mxu0 0
    %144 = vmatprep.subr.bf16.mxu0 0
    %145 = vmatpush1.bf16.msra.mxu0 0
    %146 = vmatprep.mubr.bf16.mxu0 0
    %147 = vmatmul.mubr.bf16.gmra.mrb[0].mxu0 %v45
    %v148 = vpop.f32.mrb[0].mxu0
    %v149 = vadd.f32 %v65, %v148
    %v150 = vpop.f32.mrb[0].mxu0
    %v151 = vpop.f32.mrb[0].mxu0
    %v152 = vadd.f32 %v65, %v151
    %v153 = vpop.f32.mrb[0].mxu0
    %154 = vdwg.mxu0
    %vm155 = vcmask 523264
    %v156 = vsel %vm155, %v149, 0.0
    %v157 = vsel %vm155, %v152, 0.0
    %v158 = vadd.f32 %v156, %v157
    %v159 = vrot.slane %v158, 4
    %v160 = vadd.f32 %v158, %v159
    %v161 = vrot.slane %v160, 2
    %v162 = vadd.f32 %v160, %v161
    %v163 = vrot.slane %v162, 1
    %v164 = vadd.f32 %v162, %v163
    %v165 = vrcp.pop 16.0
    %v166 = vmul.f32 %v164, %v165
    %v167 = vsub.f32 %v149, %v166
    %v168 = vsub.f32 %v152, %v166
    %v169 = vmul.f32 %v167, %v167
    %v170 = vmul.f32 %v168, %v168
    %v171 = vsel %vm155, %v169, 0.0
    %v172 = vsel %vm155, %v170, 0.0
    %v173 = vadd.f32 %v171, %v172
    %v174 = vrot.slane %v173, 4
    %v175 = vadd.f32 %v173, %v174
    %v176 = vrot.slane %v175, 2
    %v177 = vadd.f32 %v175, %v176
    %v178 = vrot.slane %v177, 1
    %v179 = vadd.f32 %v177, %v178
    %v180 = vmul.f32 %v179, %v165
    %v181 = vadd.f32 %v180, 1e-05
    %v182 = vrsqrt.pop %v181
    %v183 = vmul.f32 %v167, %v182
    %v184 = vmul.f32 %v168, %v182
    %v185 = vlaneseq
    %v186 = vshrl.u32 %v185, 7
    %v187 = vsub.s32 1, %v186
    %v188 = vrot.slane %v44, %v187
    %v189 = vmul.f32 %v183, %v188
    %v190 = vmul.f32 %v184, %v188
    %v191 = vlaneseq
    %v192 = vshrl.u32 %v191, 7
    %v193 = vsub.s32 2, %v192
    %v194 = vrot.slane %v44, %v193
    %v195 = vadd.f32 %v189, %v194
    %v196 = vadd.f32 %v190, %v194
    %vm197 = vcmp.ge.f32.partialorder %v195, 0.0
    %vm198 = vcmp.ge.f32.partialorder %v196, 0.0
    %v200 = vrot.slane %v44, 7
    %s201 = vtos %v200
    %v202 = vstv %s201
    %v204 = vmul.f32 %v202, %v195
    %v205 = vmul.f32 %v202, %v196
    %v206 = vsel %vm197, %v195, %v204
    %v207 = vsel %vm198, %v196, %v205
    %v208 = vpack.c.bf16 %v207, %v206
    %v209 = vld [vmem:[%s2] sm:$0xf]
    %v210 = vld [vmem:[%s2 + $0x4] sm:$0xf]
    %v211 = vld [vmem:[%s2 + $0x8] sm:$0xf]
    %v212 = vld [vmem:[%s2 + $0xc] sm:$0xf]
    %v213 = vld [vmem:[%s2 + $0x10] sm:$0xf]
    %v214 = vld [vmem:[%s2 + $0x14] sm:$0xf]
    %v215 = vld [vmem:[%s2 + $0x18] sm:$0xf]
    %v216 = vld [vmem:[%s2 + $0x1c] sm:$0xf]
    %v217 = vlaneseq
    %v218 = vshrl.u32 %v217, 7
    %v219 = vsub.s32 3, %v218
    %v220 = vrot.slane %v44, %v219
    %v229 = vunpack.c.l.b16 %v209
    %v230 = vunpack.c.l.b16 %v210
    %v231 = vunpack.c.l.b16 %v211
    %v232 = vunpack.c.l.b16 %v212
    %v233 = vunpack.c.l.b16 %v213
    %v234 = vunpack.c.l.b16 %v214
    %v235 = vunpack.c.l.b16 %v215
    %v236 = vunpack.c.l.b16 %v216
    %v237 = vpack.c.b16 %v230, %v229
    %v238 = vpack.c.b16 %v232, %v231
    %v239 = vpack.c.b16 %v234, %v233
    %v240 = vpack.c.b16 %v236, %v235
    %v246 = vsel %vm155, %v208, 0
    %248 = vmatprep.subr.bf16.mxu0 0
    %249 = vmatpush1.bf16.msra.mxu0 %v237
    %250 = vmatprep.subr.bf16.mxu0 0
    %251 = vmatpush1.bf16.msra.mxu0 %v238
    %252 = vmatprep.subr.bf16.mxu0 0
    %253 = vmatpush1.bf16.msra.mxu0 %v239
    %254 = vmatprep.subr.bf16.mxu0 0
    %255 = vmatpush1.bf16.msra.mxu0 %v240
    %256 = vmatprep.subr.bf16.mxu0 0
    %257 = vmatpush1.bf16.msra.mxu0 0
    %258 = vmatprep.subr.bf16.mxu0 0
    %259 = vmatpush1.bf16.msra.mxu0 0
    %260 = vmatprep.subr.bf16.mxu0 0
    %261 = vmatpush1.bf16.msra.mxu0 0
    %262 = vmatprep.subr.bf16.mxu0 0
    %263 = vmatpush1.bf16.msra.mxu0 0
    %264 = vmatprep.subr.bf16.mxu0 0
    %265 = vmatpush1.bf16.msra.mxu0 0
    %266 = vmatprep.subr.bf16.mxu0 0
    %267 = vmatpush1.bf16.msra.mxu0 0
    %268 = vmatprep.subr.bf16.mxu0 0
    %269 = vmatpush1.bf16.msra.mxu0 0
    %270 = vmatprep.subr.bf16.mxu0 0
    %271 = vmatpush1.bf16.msra.mxu0 0
    %272 = vmatprep.subr.bf16.mxu0 0
    %273 = vmatpush1.bf16.msra.mxu0 0
    %274 = vmatprep.subr.bf16.mxu0 0
    %275 = vmatpush1.bf16.msra.mxu0 0
    %276 = vmatprep.subr.bf16.mxu0 0
    %277 = vmatpush1.bf16.msra.mxu0 0
    %278 = vmatprep.subr.bf16.mxu0 0
    %279 = vmatpush1.bf16.msra.mxu0 0
    %280 = vmatprep.mubr.bf16.mxu0 0
    %281 = vmatmul.mubr.bf16.gmra.mrb[0].mxu0 %v246
    %v282 = vpop.f32.mrb[0].mxu0
    %v283 = vadd.f32 %v220, %v282
    %v284 = vpop.f32.mrb[0].mxu0
    %v285 = vpop.f32.mrb[0].mxu0
    %v286 = vadd.f32 %v220, %v285
    %v287 = vpop.f32.mrb[0].mxu0
    %288 = vdwg.mxu0
    %v289 = vadd.f32 %v283, %v286
    %v290 = vrot.slane %v289, 4
    %v291 = vadd.f32 %v289, %v290
    %v292 = vrot.slane %v291, 2
    %v293 = vadd.f32 %v291, %v292
    %v294 = vrot.slane %v293, 1
    %v295 = vadd.f32 %v293, %v294
    %v296 = vmul.f32 %v295, %v165
    %v297 = vsub.f32 %v283, %v296
    %v298 = vsub.f32 %v286, %v296
    %v299 = vmul.f32 %v297, %v297
    %v300 = vmul.f32 %v298, %v298
    %v301 = vadd.f32 %v299, %v300
    %v302 = vrot.slane %v301, 4
    %v303 = vadd.f32 %v301, %v302
    %v304 = vrot.slane %v303, 2
    %v305 = vadd.f32 %v303, %v304
    %v306 = vrot.slane %v305, 1
    %v307 = vadd.f32 %v305, %v306
    %v308 = vmul.f32 %v307, %v165
    %v309 = vadd.f32 %v308, 1e-05
    %v310 = vrsqrt.pop %v309
    %v311 = vmul.f32 %v297, %v310
    %v312 = vmul.f32 %v298, %v310
    %v313 = vlaneseq
    %v314 = vshrl.u32 %v313, 7
    %v315 = vsub.s32 4, %v314
    %v316 = vrot.slane %v44, %v315
    %v317 = vmul.f32 %v311, %v316
    %v318 = vmul.f32 %v312, %v316
    %v319 = vlaneseq
    %v320 = vshrl.u32 %v319, 7
    %v321 = vsub.s32 5, %v320
    %v322 = vrot.slane %v44, %v321
    %v323 = vadd.f32 %v317, %v322
    %v324 = vadd.f32 %v318, %v322
    %vm325 = vcmp.ge.f32.partialorder %v323, 0.0
    %vm326 = vcmp.ge.f32.partialorder %v324, 0.0
    %327 = vrot.lane.b32.xlu0 %v200, 127
    %v328 = vpop.permute.xlu0 %327
    %s329 = vtos %v328
    %v330 = vstv %s329
    %v332 = vmul.f32 %v330, %v323
    %v333 = vmul.f32 %v330, %v324
    %v334 = vsel %vm325, %v323, %v332
    %v335 = vsel %vm326, %v324, %v333
    %v336 = vld [vmem:[#allocation2] sm:$0xff]
    %v337 = vld [vmem:[#allocation2 + $0x8] sm:$0xff]
    %v338 = vld [vmem:[#allocation2 + $0x10] sm:$0xff]
    %v339 = vld [vmem:[#allocation2 + $0x18] sm:$0xff]
    %v340 = vld [vmem:[#allocation2 + $0x20] sm:$0xff]
    %v341 = vld [vmem:[#allocation2 + $0x28] sm:$0xff]
    %v342 = vld [vmem:[#allocation2 + $0x30] sm:$0xff]
    %v343 = vld [vmem:[#allocation2 + $0x38] sm:$0xff]
    %v344 = vld [vmem:[#allocation2 + $0x40] sm:$0xff]
    %v345 = vld [vmem:[#allocation2 + $0x48] sm:$0xff]
    %v346 = vld [vmem:[#allocation2 + $0x50] sm:$0xff]
    %v347 = vld [vmem:[#allocation2 + $0x58] sm:$0xff]
    %v348 = vld [vmem:[#allocation2 + $0x60] sm:$0xff]
    %v349 = vld [vmem:[#allocation2 + $0x68] sm:$0xff]
    %v350 = vld [vmem:[#allocation2 + $0x70] sm:$0xff]
    %v351 = vld [vmem:[#allocation2 + $0x78] sm:$0xff]
    %v352 = vpack.c.bf16 %v335, %v334
    %v369 = vunpack.c.l.b16 %v336
    %v370 = vunpack.c.h.b16 %v336
    %v371 = vunpack.c.l.b16 %v337
    %v372 = vunpack.c.h.b16 %v337
    %v373 = vunpack.c.l.b16 %v338
    %v374 = vunpack.c.h.b16 %v338
    %v375 = vunpack.c.l.b16 %v339
    %v376 = vunpack.c.h.b16 %v339
    %v377 = vunpack.c.l.b16 %v340
    %v378 = vunpack.c.h.b16 %v340
    %v379 = vunpack.c.l.b16 %v341
    %v380 = vunpack.c.h.b16 %v341
    %v381 = vunpack.c.l.b16 %v342
    %v382 = vunpack.c.h.b16 %v342
    %v383 = vunpack.c.l.b16 %v343
    %v384 = vunpack.c.h.b16 %v343
    %v385 = vunpack.c.l.b16 %v344
    %v386 = vunpack.c.h.b16 %v344
    %v387 = vunpack.c.l.b16 %v345
    %v388 = vunpack.c.h.b16 %v345
    %v389 = vunpack.c.l.b16 %v346
    %v390 = vunpack.c.h.b16 %v346
    %v391 = vunpack.c.l.b16 %v347
    %v392 = vunpack.c.h.b16 %v347
    %v393 = vunpack.c.l.b16 %v348
    %v394 = vunpack.c.h.b16 %v348
    %v395 = vunpack.c.l.b16 %v349
    %v396 = vunpack.c.h.b16 %v349
    %v397 = vunpack.c.l.b16 %v350
    %v398 = vunpack.c.h.b16 %v350
    %v399 = vunpack.c.l.b16 %v351
    %v400 = vunpack.c.h.b16 %v351
    %v401 = vpack.c.b16 %v371, %v369
    %v402 = vpack.c.b16 %v372, %v370
    %v403 = vpack.c.b16 %v375, %v373
    %v404 = vpack.c.b16 %v376, %v374
    %v405 = vpack.c.b16 %v379, %v377
    %v406 = vpack.c.b16 %v380, %v378
    %v407 = vpack.c.b16 %v383, %v381
    %v408 = vpack.c.b16 %v384, %v382
    %v409 = vpack.c.b16 %v387, %v385
    %v410 = vpack.c.b16 %v388, %v386
    %v411 = vpack.c.b16 %v391, %v389
    %v412 = vpack.c.b16 %v392, %v390
    %v413 = vpack.c.b16 %v395, %v393
    %v414 = vpack.c.b16 %v396, %v394
    %v415 = vpack.c.b16 %v399, %v397
    %v416 = vpack.c.b16 %v400, %v398
    %433 = vmatprep.subr.bf16.mxu0 %v402
    %434 = vmatpush1.bf16.msra.mxu0 %v401
    %435 = vmatprep.subr.bf16.mxu0 %v404
    %436 = vmatpush1.bf16.msra.mxu0 %v403
    %437 = vmatprep.subr.bf16.mxu0 %v406
    %438 = vmatpush1.bf16.msra.mxu0 %v405
    %439 = vmatprep.subr.bf16.mxu0 %v408
    %440 = vmatpush1.bf16.msra.mxu0 %v407
    %441 = vmatprep.subr.bf16.mxu0 %v410
    %442 = vmatpush1.bf16.msra.mxu0 %v409
    %443 = vmatprep.subr.bf16.mxu0 %v412
    %444 = vmatpush1.bf16.msra.mxu0 %v411
    %445 = vmatprep.subr.bf16.mxu0 %v414
    %446 = vmatpush1.bf16.msra.mxu0 %v413
    %447 = vmatprep.subr.bf16.mxu0 %v416
    %448 = vmatpush1.bf16.msra.mxu0 %v415
    %449 = vmatprep.subr.bf16.mxu0 0
    %450 = vmatpush1.bf16.msra.mxu0 0
    %451 = vmatprep.subr.bf16.mxu0 0
    %452 = vmatpush1.bf16.msra.mxu0 0
    %453 = vmatprep.subr.bf16.mxu0 0
    %454 = vmatpush1.bf16.msra.mxu0 0
    %455 = vmatprep.subr.bf16.mxu0 0
    %456 = vmatpush1.bf16.msra.mxu0 0
    %457 = vmatprep.subr.bf16.mxu0 0
    %458 = vmatpush1.bf16.msra.mxu0 0
    %459 = vmatprep.subr.bf16.mxu0 0
    %460 = vmatpush1.bf16.msra.mxu0 0
    %461 = vmatprep.subr.bf16.mxu0 0
    %462 = vmatpush1.bf16.msra.mxu0 0
    %463 = vmatprep.subr.bf16.mxu0 0
    %464 = vmatpush1.bf16.msra.mxu0 0
    %465 = vmatprep.mubr.bf16.mxu0 0
    %466 = vmatmul.mubr.bf16.gmra.mrb[0].mxu0 %v352
    %v467 = vpop.f32.mrb[0].mxu0
    %v468 = vadd.f32 0.0, %v467
    %v469 = vpop.f32.mrb[0].mxu0
    %v470 = vadd.f32 0.0, %v469
    %v471 = vpop.f32.mrb[0].mxu0
    %v472 = vadd.f32 0.0, %v471
    %v473 = vpop.f32.mrb[0].mxu0
    %v474 = vadd.f32 0.0, %v473
    %475 = vdwg.mxu0
    %v476 = vlaneseq
    %v477 = vshrl.u32 %v476, 7
    %v478 = vsub.s32 6, %v477
    %v479 = vrot.slane %v44, %v478
    %v480 = vadd.f32 %v468, %v479
    %v481 = vadd.f32 %v472, %v479
    %v482 = vrot.slane %v336, 4
    %v483 = vrot.slane %v337, 4
    %v484 = vrot.slane %v338, 4
    %v485 = vrot.slane %v339, 4
    %v486 = vrot.slane %v340, 4
    %v487 = vrot.slane %v341, 4
    %v488 = vrot.slane %v342, 4
    %v489 = vrot.slane %v343, 4
    %v490 = vrot.slane %v344, 4
    %v491 = vrot.slane %v345, 4
    %v492 = vrot.slane %v346, 4
    %v493 = vrot.slane %v347, 4
    %v494 = vrot.slane %v348, 4
    %v495 = vrot.slane %v349, 4
    %v496 = vrot.slane %v350, 4
    %v497 = vrot.slane %v351, 4
    %v514 = vunpack.c.l.bf16 %v482
    %v515 = vunpack.c.l.bf16 %v483
    %v516 = vunpack.c.l.bf16 %v484
    %v517 = vunpack.c.l.bf16 %v485
    %v518 = vunpack.c.l.bf16 %v486
    %v519 = vunpack.c.l.bf16 %v487
    %v520 = vunpack.c.l.bf16 %v488
    %v521 = vunpack.c.l.bf16 %v489
    %v522 = vunpack.c.l.bf16 %v490
    %v523 = vunpack.c.l.bf16 %v491
    %v524 = vunpack.c.l.bf16 %v492
    %v525 = vunpack.c.l.bf16 %v493
    %v526 = vunpack.c.l.bf16 %v494
    %v527 = vunpack.c.l.bf16 %v495
    %v528 = vunpack.c.l.bf16 %v496
    %v529 = vunpack.c.l.bf16 %v497
    %v530 = vmul.f32 %v514, %v514
    %v531 = vmul.f32 %v515, %v515
    %v532 = vmul.f32 %v516, %v516
    %v533 = vmul.f32 %v517, %v517
    %v534 = vmul.f32 %v518, %v518
    %v535 = vmul.f32 %v519, %v519
    %v536 = vmul.f32 %v520, %v520
    %v537 = vmul.f32 %v521, %v521
    %v538 = vmul.f32 %v522, %v522
    %v539 = vmul.f32 %v523, %v523
    %v540 = vmul.f32 %v524, %v524
    %v541 = vmul.f32 %v525, %v525
    %v542 = vmul.f32 %v526, %v526
    %v543 = vmul.f32 %v527, %v527
    %v544 = vmul.f32 %v528, %v528
    %v545 = vmul.f32 %v529, %v529
    %v546 = vadd.f32 %v530, %v531
    %v547 = vadd.f32 %v546, %v532
    %v548 = vadd.f32 %v547, %v533
    %v549 = vadd.f32 %v548, %v534
    %v550 = vadd.f32 %v549, %v535
    %v551 = vadd.f32 %v550, %v536
    %v552 = vadd.f32 %v551, %v537
    %v553 = vadd.f32 %v552, %v538
    %v554 = vadd.f32 %v553, %v539
    %v555 = vadd.f32 %v554, %v540
    %v556 = vadd.f32 %v555, %v541
    %v557 = vadd.f32 %v556, %v542
    %v558 = vadd.f32 %v557, %v543
    %v559 = vadd.f32 %v558, %v544
    %v560 = vadd.f32 %v559, %v545
    %v561 = vrot.slane %v560, 4
    %v562 = vadd.f32 %v560, %v561
    %v563 = vrot.slane %v562, 2
    %v564 = vadd.f32 %v562, %v563
    %v565 = vrot.slane %v564, 1
    %v566 = vadd.f32 %v564, %v565
    %v567 = vmul.f32 %v334, %v334
    %v568 = vmul.f32 %v335, %v335
    %569 = vadd.xlane.f32.xlu0 %v567
    %v570 = vpop.xlane.xlu0 %569
    %571 = vadd.xlane.f32.xlu0 %v568
    %v572 = vpop.xlane.xlu0 %571
    %v573 = vadd.f32 %v570, %v566
    %v574 = vadd.f32 %v572, %v566
    %v575 = vmul.f32 %v470, 2.0
    %v576 = vmul.f32 %v474, 2.0
    %v577 = vsub.f32 %v573, %v575
    %v578 = vsub.f32 %v574, %v576
    %v579 = vmax.f32 %v577, 0.0
    %v580 = vmax.f32 %v578, 0.0
    %v581 = vmul.f32 %v579, 2.0
    %v582 = vmul.f32 %v580, 2.0
    %v583 = vadd.f32 %v581, 1.0
    %v584 = vadd.f32 %v582, 1.0
    %v585 = vrcp.pop %v583
    %v586 = vmul.f32 1.0, %v585
    %v587 = vrcp.pop %v584
    %v588 = vmul.f32 1.0, %v587
    %v589 = vlog2.pop %v586
    %v590 = vmul.f32 %v589, 0.6931472
    %v591 = vlog2.pop %v588
    %v592 = vmul.f32 %v591, 0.6931472
    %v593 = vmul.f32 %v590, 0.75
    %v594 = vmul.f32 %v592, 0.75
    %v595 = vmul.f32 %v593, 1.442695
    %v596 = vpow.pop %v595
    %v597 = vmul.f32 %v594, 1.442695
    %v598 = vpow.pop %v597
    %v599 = vlaneseq
    %v600 = vand.u32 %v599, 127
    %vm601 = vcmp.lt.s32.totalorder %v600, 8
    %v602 = vsel %vm601, 1, 0
    %vm603 = vcmp.eq.s32.totalorder %v602, 1
    %v604 = vsel %vm603, %v596, 0.0
    %v605 = vsel %vm603, %v598, 0.0
    %606 = vadd.xlane.f32.xlu0 %v604
    %v607 = vpop.xlane.xlu0 %606
    %608 = vadd.xlane.f32.xlu0 %v605
    %v609 = vpop.xlane.xlu0 %608
    %v610 = vrcp.pop %v607
    %v611 = vmul.f32 %v604, %v610
    %v612 = vrcp.pop %v609
    %v613 = vmul.f32 %v605, %v612
    %v614 = vadd.f32 %v611, %v613
    %v615 = vrot.slane %v614, 4
    %v616 = vadd.f32 %v614, %v615
    %v617 = vrot.slane %v616, 2
    %v618 = vadd.f32 %v616, %v617
    %v619 = vrot.slane %v618, 1
    %v620 = vadd.f32 %v618, %v619
    %v621 = vmul.f32 %v611, %v611
    %v622 = vmul.f32 %v613, %v613
    %v623 = vsel %vm601, %v620, 1.0
    %v624 = vrcp.pop %v623
    %v625 = vmul.f32 %v621, %v624
    %v626 = vmul.f32 %v622, %v624
    %627 = vadd.xlane.f32.xlu0 %v625
    %v628 = vpop.xlane.xlu0 %627
    %629 = vadd.xlane.f32.xlu0 %v626
    %v630 = vpop.xlane.xlu0 %629
    %v631 = vrcp.pop %v628
    %v632 = vmul.f32 %v625, %v631
    %v633 = vrcp.pop %v630
    %v634 = vmul.f32 %v626, %v633
    %v635 = vsel %vm603, %v632, 1.0
    %v636 = vsel %vm603, %v634, 1.0
    %v637 = vsel %vm603, %v611, 1.0
    %v638 = vsel %vm603, %v613, 1.0
    %v639 = vlog2.pop %v635
    %v640 = vmul.f32 %v639, 0.6931472
    %v641 = vlog2.pop %v636
    %v642 = vmul.f32 %v641, 0.6931472
    %v643 = vlog2.pop %v637
    %v644 = vmul.f32 %v643, 0.6931472
    %v645 = vlog2.pop %v638
    %v646 = vmul.f32 %v645, 0.6931472
    %v647 = vsub.f32 %v640, %v644
    %v648 = vsub.f32 %v642, %v646
    %v649 = vmul.f32 %v632, %v647
    %v650 = vmul.f32 %v634, %v648
    %651 = vadd.xlane.f32.xlu0 %v649
    %v652 = vpop.xlane.xlu0 %651
    %653 = vadd.xlane.f32.xlu0 %v650
    %v654 = vpop.xlane.xlu0 %653
    %v655 = vadd.f32 %v652, %v654
    %v656 = vrot.slane %v655, 4
    %v657 = vadd.f32 %v655, %v656
    %v658 = vrot.slane %v657, 2
    %v659 = vadd.f32 %v657, %v658
    %v660 = vrot.slane %v659, 1
    %v661 = vadd.f32 %v659, %v660
    %v662 = vmul.f32 %v661, 0.0625
    %v663 = vsub.f32 %v480, %v42
    %v664 = vsub.f32 %v481, %v43
    %v665 = vmul.f32 %v663, %v663
    %v666 = vmul.f32 %v664, %v664
    %667 = vadd.xlane.f32.xlu0 %v665
    %v668 = vpop.xlane.xlu0 %667
    %669 = vadd.xlane.f32.xlu0 %v666
    %v670 = vpop.xlane.xlu0 %669
    %v671 = vadd.f32 %v668, %v670
    %v672 = vrot.slane %v671, 4
    %v673 = vadd.f32 %v671, %v672
    %v674 = vrot.slane %v673, 2
    %v675 = vadd.f32 %v673, %v674
    %v676 = vrot.slane %v675, 1
    %v677 = vadd.f32 %v675, %v676
    %v678 = vmul.f32 %v677, 0.00048828125
    %679 = vadd.xlane.f32.xlu0 %v620
    %v680 = vpop.xlane.xlu0 %679
    %v681 = vmul.f32 %v680, 0.125
    %v682 = vsub.f32 %v620, %v681
    %v683 = vsel %vm601, %v682, 0.0
    %v684 = vmul.f32 %v683, %v683
    %685 = vadd.xlane.f32.xlu0 %v684
    %v686 = vpop.xlane.xlu0 %685
    %v687 = vrcp.pop 7.0
    %v688 = vmul.f32 %v686, %v687
    %v689 = vrsqrt.pop %v688
    %v690 = vmul.f32 %v688, %v689
    %vm691 = vcmp.eq.f32.partialorder %v688, inf
    %v692 = vsel %vm691, %v688, %v690
    %vm693 = vcmp.eq.f32.partialorder %v688, 0.0
    %v694 = vand.u32 %v688, 2147483648
    %v695 = vsel %vm693, %v694, %v692
    %v696 = vrcp.pop %v681
    %v697 = vmul.f32 %v695, %v696
    %v698 = vmul.f32 %v678, 0.1
    %v699 = vadd.f32 %v662, %v698
    %v700 = vmul.f32 %v697, 0.01
    %v701 = vadd.f32 %v699, %v700
    %v702 = vpack.c.bf16 %v613, %v611
    %703 = vxpose.xlu0.c.b16.start [1/8] %v352, 128
    %704 = vxpose.xlu0.c.b16.cont [2/8] 0, 128
    %705 = vxpose.xlu0.c.b16.cont [3/8] 0, 128
    %706 = vxpose.xlu0.c.b16.cont [4/8] 0, 128
    %707 = vxpose.xlu0.c.b16.cont [5/8] 0, 128
    %708 = vxpose.xlu0.c.b16.cont [6/8] 0, 128
    %709 = vxpose.xlu0.c.b16.cont [7/8] 0, 128
    %710 = vxpose.xlu0.c.b16.end [8/8] 0, 128
    %v711 = vpop.trf.xlu0
    %v712 = vpop.trf.xlu0
    %v713 = vpop.trf.xlu0
    %v714 = vpop.trf.xlu0
    %v715 = vpop.trf.xlu0
    %v716 = vpop.trf.xlu0
    %v717 = vpop.trf.xlu0
    %v718 = vpop.trf.xlu0
    %vm719 = vcmask 130048
    %v721 = vsel %vm719, %v711, 0
    %v724 = vsel %vm719, %v712, 0
    %v727 = vsel %vm719, %v713, 0
    %v730 = vsel %vm719, %v714, 0
    %v733 = vsel %vm719, %v715, 0
    %v736 = vsel %vm719, %v716, 0
    %v739 = vsel %vm719, %v717, 0
    %v742 = vsel %vm719, %v718, 0
    %744 = vmatprep.subr.bf16.mxu0 0
    %745 = vmatpush1.bf16.msra.mxu0 %v702
    %746 = vmatprep.subr.bf16.mxu0 0
    %747 = vmatpush1.bf16.msra.mxu0 0
    %748 = vmatprep.subr.bf16.mxu0 0
    %749 = vmatpush1.bf16.msra.mxu0 0
    %750 = vmatprep.subr.bf16.mxu0 0
    %751 = vmatpush1.bf16.msra.mxu0 0
    %752 = vmatprep.subr.bf16.mxu0 0
    %753 = vmatpush1.bf16.msra.mxu0 0
    %754 = vmatprep.subr.bf16.mxu0 0
    %755 = vmatpush1.bf16.msra.mxu0 0
    %756 = vmatprep.subr.bf16.mxu0 0
    %757 = vmatpush1.bf16.msra.mxu0 0
    %758 = vmatprep.subr.bf16.mxu0 0
    %759 = vmatpush1.bf16.msra.mxu0 0
    %760 = vmatprep.subr.bf16.mxu0 0
    %761 = vmatpush1.bf16.msra.mxu0 0
    %762 = vmatprep.subr.bf16.mxu0 0
    %763 = vmatpush1.bf16.msra.mxu0 0
    %764 = vmatprep.subr.bf16.mxu0 0
    %765 = vmatpush1.bf16.msra.mxu0 0
    %766 = vmatprep.subr.bf16.mxu0 0
    %767 = vmatpush1.bf16.msra.mxu0 0
    %768 = vmatprep.subr.bf16.mxu0 0
    %769 = vmatpush1.bf16.msra.mxu0 0
    %770 = vmatprep.subr.bf16.mxu0 0
    %771 = vmatpush1.bf16.msra.mxu0 0
    %772 = vmatprep.subr.bf16.mxu0 0
    %773 = vmatpush1.bf16.msra.mxu0 0
    %774 = vmatprep.subr.bf16.mxu0 0
    %775 = vmatpush1.bf16.msra.mxu0 0
    %776 = vmatprep.mubr.bf16.mxu0 0
    %777 = vmatmul.mubr.bf16.gmra.mrb[0].mxu0 %v721
    %v778 = vpop.f32.mrb[0].mxu0
    %v779 = vadd.f32 0.0, %v778
    %v780 = vpop.f32.mrb[0].mxu0
    %v781 = vpop.f32.mrb[0].mxu0
    %v782 = vadd.f32 0.0, %v781
    %v783 = vpop.f32.mrb[0].mxu0
    %784 = vmatprep.mubr.bf16.mxu0 0
    %785 = vmatmul.mubr.bf16.gmra.mrb[0].mxu0 %v724
    %v786 = vpop.f32.mrb[0].mxu0
    %v787 = vadd.f32 0.0, %v786
    %v788 = vpop.f32.mrb[0].mxu0
    %v789 = vpop.f32.mrb[0].mxu0
    %v790 = vadd.f32 0.0, %v789
    %v791 = vpop.f32.mrb[0].mxu0
    %792 = vmatprep.mubr.bf16.mxu0 0
    %793 = vmatmul.mubr.bf16.gmra.mrb[0].mxu0 %v727
    %v794 = vpop.f32.mrb[0].mxu0
    %v795 = vadd.f32 0.0, %v794
    %v796 = vpop.f32.mrb[0].mxu0
    %v797 = vpop.f32.mrb[0].mxu0
    %v798 = vadd.f32 0.0, %v797
    %v799 = vpop.f32.mrb[0].mxu0
    %800 = vmatprep.mubr.bf16.mxu0 0
    %801 = vmatmul.mubr.bf16.gmra.mrb[0].mxu0 %v730
    %v802 = vpop.f32.mrb[0].mxu0
    %v803 = vadd.f32 0.0, %v802
    %v804 = vpop.f32.mrb[0].mxu0
    %v805 = vpop.f32.mrb[0].mxu0
    %v806 = vadd.f32 0.0, %v805
    %v807 = vpop.f32.mrb[0].mxu0
    %808 = vmatprep.mubr.bf16.mxu0 0
    %809 = vmatmul.mubr.bf16.gmra.mrb[0].mxu0 %v733
    %v810 = vpop.f32.mrb[0].mxu0
    %v811 = vadd.f32 0.0, %v810
    %v812 = vpop.f32.mrb[0].mxu0
    %v813 = vpop.f32.mrb[0].mxu0
    %v814 = vadd.f32 0.0, %v813
    %v815 = vpop.f32.mrb[0].mxu0
    %816 = vmatprep.mubr.bf16.mxu0 0
    %817 = vmatmul.mubr.bf16.gmra.mrb[0].mxu0 %v736
    %v818 = vpop.f32.mrb[0].mxu0
    %v819 = vadd.f32 0.0, %v818
    %v820 = vpop.f32.mrb[0].mxu0
    %v821 = vpop.f32.mrb[0].mxu0
    %v822 = vadd.f32 0.0, %v821
    %v823 = vpop.f32.mrb[0].mxu0
    %824 = vmatprep.mubr.bf16.mxu0 0
    %825 = vmatmul.mubr.bf16.gmra.mrb[0].mxu0 %v739
    %v826 = vpop.f32.mrb[0].mxu0
    %v827 = vadd.f32 0.0, %v826
    %v828 = vpop.f32.mrb[0].mxu0
    %v829 = vpop.f32.mrb[0].mxu0
    %v830 = vadd.f32 0.0, %v829
    %v831 = vpop.f32.mrb[0].mxu0
    %832 = vmatprep.mubr.bf16.mxu0 0
    %833 = vmatmul.mubr.bf16.gmra.mrb[0].mxu0 %v742
    %v834 = vpop.f32.mrb[0].mxu0
    %v835 = vadd.f32 0.0, %v834
    %v836 = vpop.f32.mrb[0].mxu0
    %v837 = vpop.f32.mrb[0].mxu0
    %v838 = vadd.f32 0.0, %v837
    %v839 = vpop.f32.mrb[0].mxu0
    %840 = vdwg.mxu0
    %841 = vst [vmem:[#allocation5] sm:$0xff] %v334
    %842 = vst [vmem:[#allocation5 + $0x8] sm:$0xff] %v335
    %843 = vst [vmem:[#allocation6] sm:$0xff] %v611
    %844 = vst [vmem:[#allocation6 + $0x8] sm:$0xff] %v613
    %845 = vst [vmem:[#allocation8] sm:$0xff] %v779
    %846 = vst [vmem:[#allocation8 + $0x8] sm:$0xff] %v782
    %847 = vst [vmem:[#allocation8 + $0x10] sm:$0xff] %v787
    %848 = vst [vmem:[#allocation8 + $0x18] sm:$0xff] %v790
    %849 = vst [vmem:[#allocation8 + $0x20] sm:$0xff] %v795
    %850 = vst [vmem:[#allocation8 + $0x28] sm:$0xff] %v798
    %851 = vst [vmem:[#allocation8 + $0x30] sm:$0xff] %v803
    %852 = vst [vmem:[#allocation8 + $0x38] sm:$0xff] %v806
    %853 = vst [vmem:[#allocation8 + $0x40] sm:$0xff] %v811
    %854 = vst [vmem:[#allocation8 + $0x48] sm:$0xff] %v814
    %855 = vst [vmem:[#allocation8 + $0x50] sm:$0xff] %v819
    %856 = vst [vmem:[#allocation8 + $0x58] sm:$0xff] %v822
    %857 = vst [vmem:[#allocation8 + $0x60] sm:$0xff] %v827
    %858 = vst [vmem:[#allocation8 + $0x68] sm:$0xff] %v830
    %859 = vst [vmem:[#allocation8 + $0x70] sm:$0xff] %v835
    %860 = vst [vmem:[#allocation8 + $0x78] sm:$0xff] %v838
    %vm861 = vcmp.eq.s32.totalorder %v600, 0
    %v862 = vsel %vm861, %v662, 0.0
    %vm863 = vcmp.eq.s32.totalorder %v600, 1
    %v864 = vsel %vm863, %v678, 0.0
    %v865 = vadd.f32 %v862, %v864
    %vm866 = vcmp.eq.s32.totalorder %v600, 2
    %v867 = vsel %vm866, %v701, 0.0
    %v868 = vadd.f32 %v865, %v867
    %vm869 = vcmp.eq.s32.totalorder %v600, 3
    %v870 = vsel %vm869, %v697, 0.0
    %v871 = vadd.f32 %v868, %v870
    %872 = vst [vmem:[#allocation9] sm:$0x1] %v871
    // Predicated region
    $region26: #{tpu_custom_call.1} parent=1 // pred_check
      _
    $region27: #{tpu_custom_call.1} parent=1 // pred_check_branch
      %874 = sbr.rel (0) target = $region29
    $region28: #{tpu_custom_call.1} parent=1 // pred_region
      %s876 = ssub.s32 256, 256
      %877 = vsyncadd [#allocation4], %s876
      %s878 = sshll.u32 [#allocation5], 4
      %s879 = int_to_ptr.vmem [resolvable:$true] %s878
      %884 = dma.vmem_to_hbm [thread:$0]  %s879, 256, %s5, [#allocation4], 128, 128, 8
    $region29: #{tpu_custom_call.1} parent=1 // pred_fallthru
      _
    // Predicated region
    $region30: #{tpu_custom_call.1} parent=1 // pred_check
      _
    $region31: #{tpu_custom_call.1} parent=1 // pred_check_branch
      %886 = sbr.rel (0) target = $region33
    $region32: #{tpu_custom_call.1} parent=1 // pred_region
      %s888 = ssub.s32 256, 256
      %889 = vsyncadd [#allocation7], %s888
      %s890 = sshll.u32 [#allocation6], 4
      %s891 = int_to_ptr.vmem [resolvable:$true] %s890
      %896 = dma.vmem_to_hbm [thread:$0]  %s891, 256, %s6, [#allocation7], 128, 128, 8
    $region33: #{tpu_custom_call.1} parent=1 // pred_fallthru
      _
    // Predicated region
    $region34: #{tpu_custom_call.1} parent=1 // pred_check
      _
    $region35: #{tpu_custom_call.1} parent=1 // pred_check_branch
      %898 = sbr.rel (0) target = $region37
    $region36: #{tpu_custom_call.1} parent=1 // pred_region
      %s900 = ssub.s32 2048, 2048
      %901 = vsyncadd [#allocation7], %s900
      %s902 = sshll.u32 [#allocation8], 4
      %s903 = int_to_ptr.vmem [resolvable:$true] %s902
      %908 = dma.vmem_to_hbm [thread:$0]  %s903, 2048, %s7, [#allocation7], 128, 128, 8
    $region37: #{tpu_custom_call.1} parent=1 // pred_fallthru
      _
    // Predicated region
    $region38: #{tpu_custom_call.1} parent=1 // pred_check
      _
    $region39: #{tpu_custom_call.1} parent=1 // pred_check_branch
      %910 = sbr.rel (0) target = $region41
    $region40: #{tpu_custom_call.1} parent=1 // pred_region
      %s912 = ssub.s32 16, 16
      %913 = vsyncadd [#allocation10], %s912
      %s915 = sshll.u32 [#allocation9], 4
      %s916 = int_to_ptr.vmem [resolvable:$true] %s915
      %918 = dma.vmem_to_hbm [thread:$0]  %s916, 16, %s8, [#allocation10]
    $region41: #{tpu_custom_call.1} parent=1 // pred_fallthru
      _
    // Predicated region
    $region42: #{tpu_custom_call.1} parent=1 // pred_check
      _
    $region43: #{tpu_custom_call.1} parent=1 // pred_check_branch
      %920 = sbr.rel (0) target = $region45
    $region44: #{tpu_custom_call.1} parent=1 // pred_region
      %921 = dma.done [#allocation4], 256
    $region45: #{tpu_custom_call.1} parent=1 // pred_fallthru
      _
    // Predicated region
    $region46: #{tpu_custom_call.1} parent=1 // pred_check
      _
    $region47: #{tpu_custom_call.1} parent=1 // pred_check_branch
      %923 = sbr.rel (0) target = $region49
    $region48: #{tpu_custom_call.1} parent=1 // pred_region
      %924 = dma.done [#allocation7], 256
    $region49: #{tpu_custom_call.1} parent=1 // pred_fallthru
      _
    // Predicated region
    $region50: #{tpu_custom_call.1} parent=1 // pred_check
      _
    $region51: #{tpu_custom_call.1} parent=1 // pred_check_branch
      %926 = sbr.rel (0) target = $region53
    $region52: #{tpu_custom_call.1} parent=1 // pred_region
      %927 = dma.done [#allocation7], 2048
    $region53: #{tpu_custom_call.1} parent=1 // pred_fallthru
      _
    // Predicated region
    $region54: #{tpu_custom_call.1} parent=1 // pred_check
      _
    $region55: #{tpu_custom_call.1} parent=1 // pred_check_branch
      %929 = sbr.rel (0) target = $region57
    $region56: #{tpu_custom_call.1} parent=1 // pred_region
      %930 = dma.done [#allocation10], 16
    $region57: #{tpu_custom_call.1} parent=1 // pred_fallthru
      _
    %931 = vsyncpa [#allocation3], 1
    %932 = vsyncpa [#allocation4], 1
    %933 = vsyncpa [#allocation7], 1
    %934 = vsyncpa [#allocation10], 1

</llo_original>
